<compile_context>
chip_gen: v7x
topology: tpu7x:2x2x1
jax: 0.10.0
libtpu: 0.0.40
codegen_flags: <defaults>
</compile_context>

<pallas_src>
import functools
import numpy as np
import jax
import jax.numpy as jnp
from jax.experimental import pallas as pl
from jax.experimental.pallas import tpu as pltpu

LOG_STD_MAX = 2.0
LOG_STD_MIN = -20.0

_LANE = 128       # TPU vreg lane width
_SUBLANE = 8      # f32 sublane count
_HALF_LOG_2PI = 0.5 * float(np.log(2.0 * np.pi))
_LOG_2 = float(np.log(2.0))


def _round_up(x, m):
    return ((x + m - 1) // m) * m


def sac_actor_kernel(act_dim,
                     obs_ref, eps_ref,
                     w_enc_ref, b_enc_ref,
                     w_heads_ref, b_heads_ref,
                     out_ref):
    # encoder: Linear + ReLU (padded lanes of feature are exactly 0)
    feature = jnp.dot(obs_ref[...], w_enc_ref[...],
                      preferred_element_type=jnp.float32)
    feature = jnp.maximum(feature + b_enc_ref[...], 0.0)

    # fused heads: single MXU matmul; mu in lanes [0,128), log_std in [128,256)
    heads = jnp.dot(feature, w_heads_ref[...],
                    preferred_element_type=jnp.float32) + b_heads_ref[...]
    mu = heads[:, :_LANE]
    log_std = jnp.clip(heads[:, _LANE:], LOG_STD_MIN, LOG_STD_MAX)
    std = jnp.exp(log_std)

    eps = eps_ref[...]                     # zero-padded beyond act_dim
    u = mu + std * eps                     # Normal.rsample
    a = jnp.tanh(u)

    # z = (u - mu) / std == eps exactly -> divide eliminated.
    log_prob = -0.5 * eps * eps - log_std - _HALF_LOG_2PI
    # tanh squash correction: 2*(log 2 - u - softplus(-2u))
    corr = 2.0 * (_LOG_2 - u - jax.nn.softplus(-2.0 * u))

    lane = jax.lax.broadcasted_iota(jnp.int32, a.shape, 1)
    valid = lane < act_dim
    # single fused reduction, padded lanes masked out
    logp = jnp.sum(jnp.where(valid, log_prob - corr, 0.0),
                   axis=1, keepdims=True)

    # lane-dense packed output: lanes [0, act_dim) = a, lane act_dim = logp
    out = jnp.where(valid, a, 0.0)
    out = jnp.where(lane == act_dim, logp, out)
    out_ref[...] = out.astype(out_ref.dtype)


def sac_actor_forward(obs, eps, params, *, batch_tile=512):
    """Returns (a, logp_pi_a) like SAC_Actor.forward(obs, deterministic=False,
    with_logprob=True). Pass eps=zeros for the deterministic path.
    # TODO(synk): for with_logprob=False / deterministic=True callers should
    # ignore the returned logp (PyTorch returns None there)."""
    w_enc, b_enc, w_mu, b_mu, w_ls, b_ls = params
    B, obs_dim = obs.shape
    hidden = w_enc.shape[1]
    act_dim = w_mu.shape[1]
    assert act_dim < _LANE, "act_dim must leave a lane free for logp packing"

    obs_p = _round_up(obs_dim, _LANE)
    hid_p = _round_up(hidden, _LANE)
    head_p = 2 * _LANE

    bt = _round_up(min(batch_tile, _round_up(B, _SUBLANE)), _SUBLANE)
    B_p = _round_up(B, bt)

    f32 = jnp.float32
    obs_pad = jnp.zeros((B_p, obs_p), f32).at[:B, :obs_dim].set(obs.astype(f32))
    eps_pad = jnp.zeros((B_p, _LANE), f32).at[:B, :act_dim].set(eps.astype(f32))
    w_enc_p = jnp.zeros((obs_p, hid_p), f32).at[:obs_dim, :hidden].set(w_enc)
    b_enc_p = jnp.zeros((1, hid_p), f32).at[:, :hidden].set(b_enc.reshape(1, hidden))
    w_heads = (jnp.zeros((hid_p, head_p), f32)
               .at[:hidden, :act_dim].set(w_mu)
               .at[:hidden, _LANE:_LANE + act_dim].set(w_ls))
    b_heads = (jnp.zeros((1, head_p), f32)
               .at[:, :act_dim].set(b_mu.reshape(1, act_dim))
               .at[:, _LANE:_LANE + act_dim].set(b_ls.reshape(1, act_dim)))

    inputs = (obs_pad, eps_pad, w_enc_p, b_enc_p, w_heads, b_heads)
    grid = (B_p // bt,)

    flops = 2 * B_p * (obs_p * hid_p + hid_p * head_p)
    transcendentals = 4 * B_p * _LANE          # exp, tanh, softplus(exp+log1p)
    bytes_accessed = (sum(int(np.prod(x.shape)) * 4 for x in inputs)
                      + B_p * _LANE * 4)

    out = pl.pallas_call(
        functools.partial(sac_actor_kernel, act_dim),
        out_shape=jax.ShapeDtypeStruct((B_p, _LANE), f32),
        grid=grid,
        in_specs=[
            pl.BlockSpec((bt, obs_p), lambda i: (i, 0)),     # obs tile
            pl.BlockSpec((bt, _LANE), lambda i: (i, 0)),     # eps tile
            pl.BlockSpec((obs_p, hid_p), lambda i: (0, 0)),  # encoder W (replicated)
            pl.BlockSpec((1, hid_p), lambda i: (0, 0)),      # encoder b
            pl.BlockSpec((hid_p, head_p), lambda i: (0, 0)), # fused head W
            pl.BlockSpec((1, head_p), lambda i: (0, 0)),     # fused head b
        ],
        out_specs=pl.BlockSpec((bt, _LANE), lambda i: (i, 0)),
        compiler_params=pltpu.CompilerParams(
            dimension_semantics=("parallel",)),
        cost_estimate=pl.CostEstimate(
            flops=flops,
            transcendentals=transcendentals,
            bytes_accessed=bytes_accessed),
    )(*inputs)

    a = out[:B, :act_dim]
    logp = out[:B, act_dim:act_dim + 1]
    return a, logp


def make_params(key, obs_dim, hidden, act_dim):
    ks = jax.random.split(key, 6)
    scale_e = 1.0 / np.sqrt(obs_dim)
    scale_h = 1.0 / np.sqrt(hidden)
    w_enc = jax.random.uniform(ks[0], (obs_dim, hidden), jnp.float32, -scale_e, scale_e)
    b_enc = jax.random.uniform(ks[1], (1, hidden), jnp.float32, -scale_e, scale_e)
    w_mu = jax.random.uniform(ks[2], (hidden, act_dim), jnp.float32, -scale_h, scale_h)
    b_mu = jax.random.uniform(ks[3], (1, act_dim), jnp.float32, -scale_h, scale_h)
    w_ls = jax.random.uniform(ks[4], (hidden, act_dim), jnp.float32, -scale_h, scale_h)
    b_ls = jax.random.uniform(ks[5], (1, act_dim), jnp.float32, -scale_h, scale_h)
    return (w_enc, b_enc, w_mu, b_mu, w_ls, b_ls)


def reference_forward(obs, eps, params):
    """Pure-JAX reference mirroring the PyTorch forward."""
    w_enc, b_enc, w_mu, b_mu, w_ls, b_ls = params
    feat = jax.nn.relu(obs @ w_enc + b_enc)
    mu = feat @ w_mu + b_mu
    log_std = jnp.clip(feat @ w_ls + b_ls, LOG_STD_MIN, LOG_STD_MAX)
    std = jnp.exp(log_std)
    u = mu + std * eps
    a = jnp.tanh(u)
    log_prob = -0.5 * ((u - mu) / std) ** 2 - log_std - 0.5 * jnp.log(2.0 * jnp.pi)
    corr = 2.0 * (jnp.log(2.0) - u - jax.nn.softplus(-2.0 * u))
    logp = jnp.sum(log_prob, axis=1, keepdims=True) - jnp.sum(corr, axis=1, keepdims=True)
    return a, logp


if __name__ == "__main__":
    key = jax.random.PRNGKey(0)
    B, obs_dim, hidden, act_dim = 2, 16, 32, 4

    k_obs, k_eps, k_par = jax.random.split(key, 3)
    obs = jax.random.normal(k_obs, (B, obs_dim), jnp.float32)
    eps = jax.random.normal(k_eps, (B, act_dim), jnp.float32)  # rsample noise
    params = make_params(k_par, obs_dim, hidden, act_dim)

    a, logp = sac_actor_forward(obs, eps, params)
    jax.block_until_ready((a, logp))

    a_ref, logp_ref = reference_forward(obs, eps, params)
    np.testing.assert_allclose(np.asarray(a), np.asarray(a_ref), rtol=1e-5, atol=1e-5)
    np.testing.assert_allclose(np.asarray(logp), np.asarray(logp_ref), rtol=1e-4, atol=1e-4)

    print("KERNEL_OK")
</pallas_src>

<mosaic_0001>
module attributes {stable_mosaic.version = 11 : i64} {
  func.func @sac_actor_kernel(%arg0: i32, %arg1: memref<8x128xf32, #tpu.memory_space<vmem>>, %arg2: memref<8x128xf32, #tpu.memory_space<vmem>>, %arg3: memref<128x128xf32, #tpu.memory_space<vmem>>, %arg4: memref<1x128xf32, #tpu.memory_space<vmem>>, %arg5: memref<128x256xf32, #tpu.memory_space<vmem>>, %arg6: memref<1x256xf32, #tpu.memory_space<vmem>>, %arg7: memref<8x128xf32, #tpu.memory_space<vmem>>) attributes {dimension_semantics = [#tpu.dimension_semantics<parallel>], iteration_bounds = array<i64: 1>, scalar_prefetch = 0 : i64, scratch_operands = 0 : i64, tpu.core_type = #tpu.core_type<tc>, window_params = [{transform_indices = @transform_0, window_bounds = array<i64: 8, 128>}, {transform_indices = @transform_1, window_bounds = array<i64: 8, 128>}, {pipeline_mode = #tpu.pipeline_mode<synchronous>, transform_indices = @transform_2, window_bounds = array<i64: 128, 128>}, {pipeline_mode = #tpu.pipeline_mode<synchronous>, transform_indices = @transform_3, window_bounds = array<i64: 1, 128>}, {pipeline_mode = #tpu.pipeline_mode<synchronous>, transform_indices = @transform_4, window_bounds = array<i64: 128, 256>}, {pipeline_mode = #tpu.pipeline_mode<synchronous>, transform_indices = @transform_5, window_bounds = array<i64: 1, 256>}, {transform_indices = @transform_6, window_bounds = array<i64: 8, 128>}]} {
    %c0 = arith.constant 0 : index
    %c0_0 = arith.constant 0 : index
    %0 = vector.load %arg1[%c0, %c0_0] : memref<8x128xf32, #tpu.memory_space<vmem>>, vector<8x128xf32>
    %c0_1 = arith.constant 0 : index
    %c0_2 = arith.constant 0 : index
    %1 = vector.load %arg3[%c0_1, %c0_2] : memref<128x128xf32, #tpu.memory_space<vmem>>, vector<128x128xf32>
    %cst = arith.constant dense<0.000000e+00> : vector<8x128xf32>
    %2 = tpu.matmul %0, %1, %cst {dimension_numbers = #tpu.dot_dimension_numbers<[1], [0], [0], [1], [0, 0, 1, 1], [], []>} : vector<8x128xf32>, vector<128x128xf32>, vector<8x128xf32> -> vector<8x128xf32>
    %c0_3 = arith.constant 0 : index
    %c0_4 = arith.constant 0 : index
    %3 = vector.load %arg4[%c0_3, %c0_4] : memref<1x128xf32, #tpu.memory_space<vmem>>, vector<1x128xf32>
    %4 = vector.broadcast %3 : vector<1x128xf32> to vector<8x128xf32>
    %5 = arith.addf %2, %4 : vector<8x128xf32>
    %cst_5 = arith.constant 0.000000e+00 : f32
    %6 = vector.broadcast %cst_5 : f32 to vector<8x128xf32>
    %7 = arith.maximumf %5, %6 : vector<8x128xf32>
    %c0_6 = arith.constant 0 : index
    %c0_7 = arith.constant 0 : index
    %8 = vector.load %arg5[%c0_6, %c0_7] : memref<128x256xf32, #tpu.memory_space<vmem>>, vector<128x256xf32>
    %cst_8 = arith.constant dense<0.000000e+00> : vector<8x256xf32>
    %9 = tpu.matmul %7, %8, %cst_8 {dimension_numbers = #tpu.dot_dimension_numbers<[1], [0], [0], [1], [0, 0, 1, 1], [], []>} : vector<8x128xf32>, vector<128x256xf32>, vector<8x256xf32> -> vector<8x256xf32>
    %c0_9 = arith.constant 0 : index
    %c0_10 = arith.constant 0 : index
    %10 = vector.load %arg6[%c0_9, %c0_10] : memref<1x256xf32, #tpu.memory_space<vmem>>, vector<1x256xf32>
    %11 = vector.broadcast %10 : vector<1x256xf32> to vector<8x256xf32>
    %12 = arith.addf %9, %11 : vector<8x256xf32>
    %13 = vector.extract_strided_slice %12 {offsets = [0, 0], sizes = [8, 128], strides = [1, 1]} : vector<8x256xf32> to vector<8x128xf32>
    %14 = vector.extract_strided_slice %12 {offsets = [0, 128], sizes = [8, 128], strides = [1, 1]} : vector<8x256xf32> to vector<8x128xf32>
    %cst_11 = arith.constant -2.000000e+01 : f32
    %cst_12 = arith.constant 2.000000e+00 : f32
    %15 = vector.broadcast %cst_11 : f32 to vector<8x128xf32>
    %16 = arith.maximumf %15, %14 : vector<8x128xf32>
    %17 = vector.broadcast %cst_12 : f32 to vector<8x128xf32>
    %18 = arith.minimumf %17, %16 : vector<8x128xf32>
    %19 = math.exp %18 : vector<8x128xf32>
    %c0_13 = arith.constant 0 : index
    %c0_14 = arith.constant 0 : index
    %20 = vector.load %arg2[%c0_13, %c0_14] : memref<8x128xf32, #tpu.memory_space<vmem>>, vector<8x128xf32>
    %21 = arith.mulf %19, %20 : vector<8x128xf32>
    %22 = arith.addf %13, %21 : vector<8x128xf32>
    %23 = math.tanh %22 : vector<8x128xf32>
    %cst_15 = arith.constant -5.000000e-01 : f32
    %24 = vector.broadcast %cst_15 : f32 to vector<8x128xf32>
    %25 = arith.mulf %24, %20 : vector<8x128xf32>
    %26 = arith.mulf %25, %20 : vector<8x128xf32>
    %27 = arith.subf %26, %18 : vector<8x128xf32>
    %cst_16 = arith.constant 0.918938517 : f32
    %28 = vector.broadcast %cst_16 : f32 to vector<8x128xf32>
    %29 = arith.subf %27, %28 : vector<8x128xf32>
    %cst_17 = arith.constant 0.693147182 : f32
    %30 = vector.broadcast %cst_17 : f32 to vector<8x128xf32>
    %31 = arith.subf %30, %22 : vector<8x128xf32>
    %cst_18 = arith.constant -2.000000e+00 : f32
    %32 = vector.broadcast %cst_18 : f32 to vector<8x128xf32>
    %33 = arith.mulf %32, %22 : vector<8x128xf32>
    %cst_19 = arith.constant 0.000000e+00 : f32
    %34 = vector.broadcast %cst_19 : f32 to vector<8x128xf32>
    %35 = arith.maximumf %33, %34 : vector<8x128xf32>
    %36 = vector.broadcast %cst_19 : f32 to vector<8x128xf32>
    %37 = arith.subf %33, %36 : vector<8x128xf32>
    %38 = arith.cmpf one, %37, %37 : vector<8x128xf32>
    %39 = vector.broadcast %cst_19 : f32 to vector<8x128xf32>
    %40 = arith.addf %33, %39 : vector<8x128xf32>
    %41 = math.absf %37 : vector<8x128xf32>
    %cst_20 = arith.constant 0.000000e+00 : f32
    %42 = vector.broadcast %cst_20 : f32 to vector<8x128xf32>
    %43 = arith.subf %42, %41 : vector<8x128xf32>
    %44 = math.exp %43 : vector<8x128xf32>
    %45 = math.log1p %44 : vector<8x128xf32>
    %46 = arith.addf %35, %45 : vector<8x128xf32>
    %47 = arith.select %38, %40, %46 : vector<8x128xi1>, vector<8x128xf32>
    %48 = arith.subf %31, %47 : vector<8x128xf32>
    %cst_21 = arith.constant 2.000000e+00 : f32
    %49 = vector.broadcast %cst_21 : f32 to vector<8x128xf32>
    %50 = arith.mulf %49, %48 : vector<8x128xf32>
    %51 = tpu.iota {dimensions = array<i32: 1>} : vector<8x128xi32>
    %c4_i32 = arith.constant 4 : i32
    %52 = vector.broadcast %c4_i32 : i32 to vector<8x128xi32>
    %53 = arith.cmpi slt, %51, %52 : vector<8x128xi32>
    %54 = arith.subf %29, %50 : vector<8x128xf32>
    %cst_22 = arith.constant 0.000000e+00 : f32
    %55 = vector.broadcast %cst_22 : f32 to vector<8x128xf32>
    %56 = arith.select %53, %54, %55 : vector<8x128xi1>, vector<8x128xf32>
    %cst_23 = arith.constant dense<0.000000e+00> : vector<8xf32>
    %57 = vector.multi_reduction <add>, %56, %cst_23 [1] : vector<8x128xf32> to vector<8xf32>
    %58 = vector.shape_cast %57 : vector<8xf32> to vector<8x1xf32>
    %cst_24 = arith.constant 0.000000e+00 : f32
    %59 = vector.broadcast %cst_24 : f32 to vector<8x128xf32>
    %60 = arith.select %53, %23, %59 : vector<8x128xi1>, vector<8x128xf32>
    %c4_i32_25 = arith.constant 4 : i32
    %61 = vector.broadcast %c4_i32_25 : i32 to vector<8x128xi32>
    %62 = arith.cmpi eq, %51, %61 : vector<8x128xi32>
    %63 = vector.shape_cast %58 : vector<8x1xf32> to vector<8x1xf32>
    %64 = vector.broadcast %63 : vector<8x1xf32> to vector<8x128xf32>
    %65 = arith.select %62, %64, %60 : vector<8x128xi1>, vector<8x128xf32>
    %c0_26 = arith.constant 0 : index
    %c0_27 = arith.constant 0 : index
    %66 = vector.load %arg7[%c0_26, %c0_27] : memref<8x128xf32, #tpu.memory_space<vmem>>, vector<8x128xf32>
    tpu.vector_store %arg7[%c0_26, %c0_27], %65 {strides = array<i32>} : memref<8x128xf32, #tpu.memory_space<vmem>>, vector<8x128xf32>,
    return
  }
  func.func @transform_0(%arg0: i32) -> (i32, i32) {
    %c0_i32 = arith.constant 0 : i32
    %c0_i32_0 = arith.constant 0 : i32
    return %arg0, %c0_i32 : i32, i32
  }
  func.func @transform_1(%arg0: i32) -> (i32, i32) {
    %c0_i32 = arith.constant 0 : i32
    %c0_i32_0 = arith.constant 0 : i32
    return %arg0, %c0_i32 : i32, i32
  }
  func.func @transform_2(%arg0: i32) -> (i32, i32) {
    %c0_i32 = arith.constant 0 : i32
    %c0_i32_0 = arith.constant 0 : i32
    %c0_i32_1 = arith.constant 0 : i32
    return %c0_i32, %c0_i32_0 : i32, i32
  }
  func.func @transform_3(%arg0: i32) -> (i32, i32) {
    %c0_i32 = arith.constant 0 : i32
    %c0_i32_0 = arith.constant 0 : i32
    %c0_i32_1 = arith.constant 0 : i32
    return %c0_i32, %c0_i32_0 : i32, i32
  }
  func.func @transform_4(%arg0: i32) -> (i32, i32) {
    %c0_i32 = arith.constant 0 : i32
    %c0_i32_0 = arith.constant 0 : i32
    %c0_i32_1 = arith.constant 0 : i32
    return %c0_i32, %c0_i32_0 : i32, i32
  }
  func.func @transform_5(%arg0: i32) -> (i32, i32) {
    %c0_i32 = arith.constant 0 : i32
    %c0_i32_0 = arith.constant 0 : i32
    %c0_i32_1 = arith.constant 0 : i32
    return %c0_i32, %c0_i32_0 : i32, i32
  }
  func.func @transform_6(%arg0: i32) -> (i32, i32) {
    %c0_i32 = arith.constant 0 : i32
    %c0_i32_0 = arith.constant 0 : i32
    return %arg0, %c0_i32 : i32, i32
  }
}

</mosaic_0001>

<llo_original>
// kernel: tpu_custom_call.1
$region0: #{tpu_custom_call.1}
  #allocation0 [shape = 'u32[]', space=smem, size = 0x4, offset = 0x4, fixed_abs, tag = 'smem constant byte address 0x4 - core index']
  #allocation1 [shape = 'u32[144,128]{1,0:T(1,128)}', space=vmem, size = 0x12000, scoped, tag = 'internal scratch']
  %s0 = inlined_call_operand.hbm [shape: f32[8,128], index: 0, kind: input, shape index: {}]
  %s1 = inlined_call_operand.hbm [shape: f32[8,128], index: 1, kind: input, shape index: {}]
  %s2 = inlined_call_operand.hbm [shape: f32[128,128], index: 2, kind: input, shape index: {}]
  %s3 = inlined_call_operand.vmem [shape: f32[1,128], index: 3, kind: input, shape index: {}]
  %s4 = inlined_call_operand.hbm [shape: f32[128,256], index: 4, kind: input, shape index: {}]
  %s5 = inlined_call_operand.vmem [shape: f32[1,256], index: 5, kind: input, shape index: {}]
  %s6 = inlined_call_operand.hbm [shape: f32[8,128], index: 6, kind: output, shape index: {}]
  %s7 = sld [smem:[#allocation0]]
  $region50: #{tpu_custom_call.1} parent=0
    _
  %s9 = ssub.s32 1, %s7
  %s10 = scalar_select 0, %s9, %s7
  $region1: #{tpu_custom_call.1} parent=0
    #allocation2 [shape = 'u8[4096]{0}', space=vmem, size = 0x1000, scoped, tag = 'input window, operand 0, single buffered']
    #allocation3 [shape = 's32[1]{0}', space=sflag, size = 0x4, scoped, tag = 'scoped memory for tpu_custom_call.1']
    #allocation4 [shape = 's32[1]{0}', space=sflag, size = 0x4, scoped, tag = 'scoped memory for tpu_custom_call.1']
    #allocation5 [shape = 'u8[4096]{0}', space=vmem, size = 0x1000, scoped, tag = 'input window, operand 1, single buffered']
    #allocation6 [shape = 's32[1]{0}', space=sflag, size = 0x4, scoped, tag = 'scoped memory for tpu_custom_call.1']
    #allocation7 [shape = 'u8[65536]{0}', space=vmem, size = 0x10000, scoped, tag = 'input window, operand 2, single buffered']
    #allocation8 [shape = 'u8[131072]{0}', space=vmem, size = 0x20000, scoped, tag = 'input window, operand 4, single buffered']
    #allocation9 [shape = 's32[1]{0}', space=sflag, size = 0x4, scoped, tag = 'scoped memory for tpu_custom_call.1']
    #allocation10 [shape = 'u8[4096]{0}', space=vmem, size = 0x1000, scoped, tag = 'output window, operand 0, single buffered']
    %11 = vsyncpa [#allocation3], 0
    %12 = vsyncpa [#allocation6], 0
    %13 = vsyncpa [#allocation9], 0
    %14 = vsyncpa [#allocation4], 0
    // Predicated region
    $region2: #{tpu_custom_call.1} parent=1 // pred_check
      _
    $region3: #{tpu_custom_call.1} parent=1 // pred_check_branch
      %16 = sbr.rel (0) target = $region5
    $region4: #{tpu_custom_call.1} parent=1 // pred_region
      %s18 = ssub.s32 128, 128
      %19 = vsyncadd [#allocation3], %s18
      %s21 = sshll.u32 [#allocation2], 4
      %s22 = int_to_ptr.vmem [resolvable:$true] %s21
      %24 = dma.hbm_to_vmem [thread:$0]  %s0, 128, %s22, [#allocation3]
    $region5: #{tpu_custom_call.1} parent=1 // pred_fallthru
      _
    // Predicated region
    $region6: #{tpu_custom_call.1} parent=1 // pred_check
      _
    $region7: #{tpu_custom_call.1} parent=1 // pred_check_branch
      %26 = sbr.rel (0) target = $region9
    $region8: #{tpu_custom_call.1} parent=1 // pred_region
      %s28 = ssub.s32 128, 128
      %29 = vsyncadd [#allocation6], %s28
      %s31 = sshll.u32 [#allocation5], 4
      %s32 = int_to_ptr.vmem [resolvable:$true] %s31
      %34 = dma.hbm_to_vmem [thread:$0]  %s1, 128, %s32, [#allocation6]
    $region9: #{tpu_custom_call.1} parent=1 // pred_fallthru
      _
    // Predicated region
    $region10: #{tpu_custom_call.1} parent=1 // pred_check
      _
    $region11: #{tpu_custom_call.1} parent=1 // pred_check_branch
      %36 = sbr.rel (0) target = $region13
    $region12: #{tpu_custom_call.1} parent=1 // pred_region
      %s38 = ssub.s32 2048, 2048
      %39 = vsyncadd [#allocation6], %s38
      %s40 = sshll.u32 [#allocation7], 4
      %s41 = int_to_ptr.vmem [resolvable:$true] %s40
      %46 = dma.hbm_to_vmem [thread:$0]  %s2, 2048, %s41, [#allocation6], 128, 128, 8
    $region13: #{tpu_custom_call.1} parent=1 // pred_fallthru
      _
    // Predicated region
    $region14: #{tpu_custom_call.1} parent=1 // pred_check
      _
    $region15: #{tpu_custom_call.1} parent=1 // pred_check_branch
      %48 = sbr.rel (0) target = $region17
    $region16: #{tpu_custom_call.1} parent=1 // pred_region
      _
    $region17: #{tpu_custom_call.1} parent=1 // pred_fallthru
      _
    // Predicated region
    $region18: #{tpu_custom_call.1} parent=1 // pred_check
      _
    $region19: #{tpu_custom_call.1} parent=1 // pred_check_branch
      %50 = sbr.rel (0) target = $region21
    $region20: #{tpu_custom_call.1} parent=1 // pred_region
      %s52 = ssub.s32 4096, 4096
      %53 = vsyncadd [#allocation9], %s52
      %s54 = sshll.u32 [#allocation8], 4
      %s55 = int_to_ptr.vmem [resolvable:$true] %s54
      %60 = dma.hbm_to_vmem [thread:$0]  %s4, 4096, %s55, [#allocation9], 256, 256, 16
    $region21: #{tpu_custom_call.1} parent=1 // pred_fallthru
      _
    // Predicated region
    $region22: #{tpu_custom_call.1} parent=1 // pred_check
      _
    $region23: #{tpu_custom_call.1} parent=1 // pred_check_branch
      %62 = sbr.rel (0) target = $region25
    $region24: #{tpu_custom_call.1} parent=1 // pred_region
      _
    $region25: #{tpu_custom_call.1} parent=1 // pred_fallthru
      _
    // Predicated region
    $region26: #{tpu_custom_call.1} parent=1 // pred_check
      _
    $region27: #{tpu_custom_call.1} parent=1 // pred_check_branch
      %64 = sbr.rel (0) target = $region29
    $region28: #{tpu_custom_call.1} parent=1 // pred_region
      %65 = dma.done [#allocation3], 128
    $region29: #{tpu_custom_call.1} parent=1 // pred_fallthru
      _
    // Predicated region
    $region30: #{tpu_custom_call.1} parent=1 // pred_check
      _
    $region31: #{tpu_custom_call.1} parent=1 // pred_check_branch
      %67 = sbr.rel (0) target = $region33
    $region32: #{tpu_custom_call.1} parent=1 // pred_region
      %68 = dma.done [#allocation6], 128
    $region33: #{tpu_custom_call.1} parent=1 // pred_fallthru
      _
    // Predicated region
    $region34: #{tpu_custom_call.1} parent=1 // pred_check
      _
    $region35: #{tpu_custom_call.1} parent=1 // pred_check_branch
      %70 = sbr.rel (0) target = $region37
    $region36: #{tpu_custom_call.1} parent=1 // pred_region
      %71 = dma.done [#allocation6], 2048
    $region37: #{tpu_custom_call.1} parent=1 // pred_fallthru
      _
    // Predicated region
    $region38: #{tpu_custom_call.1} parent=1 // pred_check
      _
    $region39: #{tpu_custom_call.1} parent=1 // pred_check_branch
      %73 = sbr.rel (0) target = $region41
    $region40: #{tpu_custom_call.1} parent=1 // pred_region
      %74 = dma.done [#allocation9], 4096
    $region41: #{tpu_custom_call.1} parent=1 // pred_fallthru
      _
    %v75 = vld [vmem:[#allocation2] sm:$0xff]
    %v76 = vld [vmem:[#allocation7] sm:$0xff]
    %v77 = vld [vmem:[#allocation7 + $0x8] sm:$0xff]
    %v78 = vld [vmem:[#allocation7 + $0x10] sm:$0xff]
    %v79 = vld [vmem:[#allocation7 + $0x18] sm:$0xff]
    %v80 = vld [vmem:[#allocation7 + $0x20] sm:$0xff]
    %v81 = vld [vmem:[#allocation7 + $0x28] sm:$0xff]
    %v82 = vld [vmem:[#allocation7 + $0x30] sm:$0xff]
    %v83 = vld [vmem:[#allocation7 + $0x38] sm:$0xff]
    %v84 = vld [vmem:[#allocation7 + $0x40] sm:$0xff]
    %v85 = vld [vmem:[#allocation7 + $0x48] sm:$0xff]
    %v86 = vld [vmem:[#allocation7 + $0x50] sm:$0xff]
    %v87 = vld [vmem:[#allocation7 + $0x58] sm:$0xff]
    %v88 = vld [vmem:[#allocation7 + $0x60] sm:$0xff]
    %v89 = vld [vmem:[#allocation7 + $0x68] sm:$0xff]
    %v90 = vld [vmem:[#allocation7 + $0x70] sm:$0xff]
    %v91 = vld [vmem:[#allocation7 + $0x78] sm:$0xff]
    %v92 = vld [vmem:[%s3] sm:$0x1]
    %v94 = vlaneseq
    %v95 = vshrl.u32 %v94, 7
    %v96 = vsub.s32 0, %v95
    %v97 = vrot.slane %v92, %v96
    %99 = vmatprep.subr.mxu0 0.0
    %100 = vmatpush1.msra.mxu0 %v76
    %101 = vmatprep.subr.mxu0 0.0
    %102 = vmatpush1.msra.mxu0 %v77
    %103 = vmatprep.subr.mxu0 0.0
    %104 = vmatpush1.msra.mxu0 %v78
    %105 = vmatprep.subr.mxu0 0.0
    %106 = vmatpush1.msra.mxu0 %v79
    %107 = vmatprep.subr.mxu0 0.0
    %108 = vmatpush1.msra.mxu0 %v80
    %109 = vmatprep.subr.mxu0 0.0
    %110 = vmatpush1.msra.mxu0 %v81
    %111 = vmatprep.subr.mxu0 0.0
    %112 = vmatpush1.msra.mxu0 %v82
    %113 = vmatprep.subr.mxu0 0.0
    %114 = vmatpush1.msra.mxu0 %v83
    %115 = vmatprep.subr.mxu0 0.0
    %116 = vmatpush1.msra.mxu0 %v84
    %117 = vmatprep.subr.mxu0 0.0
    %118 = vmatpush1.msra.mxu0 %v85
    %119 = vmatprep.subr.mxu0 0.0
    %120 = vmatpush1.msra.mxu0 %v86
    %121 = vmatprep.subr.mxu0 0.0
    %122 = vmatpush1.msra.mxu0 %v87
    %123 = vmatprep.subr.mxu0 0.0
    %124 = vmatpush1.msra.mxu0 %v88
    %125 = vmatprep.subr.mxu0 0.0
    %126 = vmatpush1.msra.mxu0 %v89
    %127 = vmatprep.subr.mxu0 0.0
    %128 = vmatpush1.msra.mxu0 %v90
    %129 = vmatprep.subr.mxu0 0.0
    %130 = vmatpush1.msra.mxu0 %v91
    %131 = vmatprep.subr.mxu0 0.0
    %132 = vmatpush1.msra.mxu0 0.0
    %133 = vmatprep.subr.mxu0 0.0
    %134 = vmatpush1.msra.mxu0 0.0
    %135 = vmatprep.subr.mxu0 0.0
    %136 = vmatpush1.msra.mxu0 0.0
    %137 = vmatprep.subr.mxu0 0.0
    %138 = vmatpush1.msra.mxu0 0.0
    %139 = vmatprep.subr.mxu0 0.0
    %140 = vmatpush1.msra.mxu0 0.0
    %141 = vmatprep.subr.mxu0 0.0
    %142 = vmatpush1.msra.mxu0 0.0
    %143 = vmatprep.subr.mxu0 0.0
    %144 = vmatpush1.msra.mxu0 0.0
    %145 = vmatprep.subr.mxu0 0.0
    %146 = vmatpush1.msra.mxu0 0.0
    %147 = vmatprep.subr.mxu0 0.0
    %148 = vmatpush1.msra.mxu0 0.0
    %149 = vmatprep.subr.mxu0 0.0
    %150 = vmatpush1.msra.mxu0 0.0
    %151 = vmatprep.subr.mxu0 0.0
    %152 = vmatpush1.msra.mxu0 0.0
    %153 = vmatprep.subr.mxu0 0.0
    %154 = vmatpush1.msra.mxu0 0.0
    %155 = vmatprep.subr.mxu0 0.0
    %156 = vmatpush1.msra.mxu0 0.0
    %157 = vmatprep.subr.mxu0 0.0
    %158 = vmatpush1.msra.mxu0 0.0
    %159 = vmatprep.subr.mxu0 0.0
    %160 = vmatpush1.msra.mxu0 0.0
    %161 = vmatprep.subr.mxu0 0.0
    %162 = vmatpush1.msra.mxu0 0.0
    %163 = vmatprep.mubr.f32.mxu0 0.0
    %164 = vmatmul.mubr.f32.gmra.mrb[0].mxu0 %v75
    %v165 = vpop.f32.mrb[0].mxu0
    %v166 = vadd.f32 %v97, %v165
    %v167 = vpop.f32.mrb[0].mxu0
    %168 = vdwg.mxu0
    %v169 = vmax.f32 %v166, 0.0
    %v170 = vld [vmem:[#allocation8] sm:$0xff]
    %v171 = vld [vmem:[#allocation8 + $0x8] sm:$0xff]
    %v172 = vld [vmem:[#allocation8 + $0x10] sm:$0xff]
    %v173 = vld [vmem:[#allocation8 + $0x18] sm:$0xff]
    %v174 = vld [vmem:[#allocation8 + $0x20] sm:$0xff]
    %v175 = vld [vmem:[#allocation8 + $0x28] sm:$0xff]
    %v176 = vld [vmem:[#allocation8 + $0x30] sm:$0xff]
    %v177 = vld [vmem:[#allocation8 + $0x38] sm:$0xff]
    %v178 = vld [vmem:[#allocation8 + $0x40] sm:$0xff]
    %v179 = vld [vmem:[#allocation8 + $0x48] sm:$0xff]
    %v180 = vld [vmem:[#allocation8 + $0x50] sm:$0xff]
    %v181 = vld [vmem:[#allocation8 + $0x58] sm:$0xff]
    %v182 = vld [vmem:[#allocation8 + $0x60] sm:$0xff]
    %v183 = vld [vmem:[#allocation8 + $0x68] sm:$0xff]
    %v184 = vld [vmem:[#allocation8 + $0x70] sm:$0xff]
    %v185 = vld [vmem:[#allocation8 + $0x78] sm:$0xff]
    %v186 = vld [vmem:[#allocation8 + $0x80] sm:$0xff]
    %v187 = vld [vmem:[#allocation8 + $0x88] sm:$0xff]
    %v188 = vld [vmem:[#allocation8 + $0x90] sm:$0xff]
    %v189 = vld [vmem:[#allocation8 + $0x98] sm:$0xff]
    %v190 = vld [vmem:[#allocation8 + $0xa0] sm:$0xff]
    %v191 = vld [vmem:[#allocation8 + $0xa8] sm:$0xff]
    %v192 = vld [vmem:[#allocation8 + $0xb0] sm:$0xff]
    %v193 = vld [vmem:[#allocation8 + $0xb8] sm:$0xff]
    %v194 = vld [vmem:[#allocation8 + $0xc0] sm:$0xff]
    %v195 = vld [vmem:[#allocation8 + $0xc8] sm:$0xff]
    %v196 = vld [vmem:[#allocation8 + $0xd0] sm:$0xff]
    %v197 = vld [vmem:[#allocation8 + $0xd8] sm:$0xff]
    %v198 = vld [vmem:[#allocation8 + $0xe0] sm:$0xff]
    %v199 = vld [vmem:[#allocation8 + $0xe8] sm:$0xff]
    %v200 = vld [vmem:[#allocation8 + $0xf0] sm:$0xff]
    %v201 = vld [vmem:[#allocation8 + $0xf8] sm:$0xff]
    %v202 = vld [vmem:[%s5] sm:$0x3]
    %v204 = vlaneseq
    %v205 = vshrl.u32 %v204, 7
    %v206 = vsub.s32 0, %v205
    %v207 = vrot.slane %v202, %v206
    %v208 = vlaneseq
    %v209 = vshrl.u32 %v208, 7
    %v210 = vsub.s32 1, %v209
    %v211 = vrot.slane %v202, %v210
    %214 = vmatprep.subr.mxu0 %v171
    %215 = vmatpush1.msra.mxu0 %v170
    %216 = vmatprep.subr.mxu0 %v173
    %217 = vmatpush1.msra.mxu0 %v172
    %218 = vmatprep.subr.mxu0 %v175
    %219 = vmatpush1.msra.mxu0 %v174
    %220 = vmatprep.subr.mxu0 %v177
    %221 = vmatpush1.msra.mxu0 %v176
    %222 = vmatprep.subr.mxu0 %v179
    %223 = vmatpush1.msra.mxu0 %v178
    %224 = vmatprep.subr.mxu0 %v181
    %225 = vmatpush1.msra.mxu0 %v180
    %226 = vmatprep.subr.mxu0 %v183
    %227 = vmatpush1.msra.mxu0 %v182
    %228 = vmatprep.subr.mxu0 %v185
    %229 = vmatpush1.msra.mxu0 %v184
    %230 = vmatprep.subr.mxu0 %v187
    %231 = vmatpush1.msra.mxu0 %v186
    %232 = vmatprep.subr.mxu0 %v189
    %233 = vmatpush1.msra.mxu0 %v188
    %234 = vmatprep.subr.mxu0 %v191
    %235 = vmatpush1.msra.mxu0 %v190
    %236 = vmatprep.subr.mxu0 %v193
    %237 = vmatpush1.msra.mxu0 %v192
    %238 = vmatprep.subr.mxu0 %v195
    %239 = vmatpush1.msra.mxu0 %v194
    %240 = vmatprep.subr.mxu0 %v197
    %241 = vmatpush1.msra.mxu0 %v196
    %242 = vmatprep.subr.mxu0 %v199
    %243 = vmatpush1.msra.mxu0 %v198
    %244 = vmatprep.subr.mxu0 %v201
    %245 = vmatpush1.msra.mxu0 %v200
    %246 = vmatprep.subr.mxu0 0.0
    %247 = vmatpush1.msra.mxu0 0.0
    %248 = vmatprep.subr.mxu0 0.0
    %249 = vmatpush1.msra.mxu0 0.0
    %250 = vmatprep.subr.mxu0 0.0
    %251 = vmatpush1.msra.mxu0 0.0
    %252 = vmatprep.subr.mxu0 0.0
    %253 = vmatpush1.msra.mxu0 0.0
    %254 = vmatprep.subr.mxu0 0.0
    %255 = vmatpush1.msra.mxu0 0.0
    %256 = vmatprep.subr.mxu0 0.0
    %257 = vmatpush1.msra.mxu0 0.0
    %258 = vmatprep.subr.mxu0 0.0
    %259 = vmatpush1.msra.mxu0 0.0
    %260 = vmatprep.subr.mxu0 0.0
    %261 = vmatpush1.msra.mxu0 0.0
    %262 = vmatprep.subr.mxu0 0.0
    %263 = vmatpush1.msra.mxu0 0.0
    %264 = vmatprep.subr.mxu0 0.0
    %265 = vmatpush1.msra.mxu0 0.0
    %266 = vmatprep.subr.mxu0 0.0
    %267 = vmatpush1.msra.mxu0 0.0
    %268 = vmatprep.subr.mxu0 0.0
    %269 = vmatpush1.msra.mxu0 0.0
    %270 = vmatprep.subr.mxu0 0.0
    %271 = vmatpush1.msra.mxu0 0.0
    %272 = vmatprep.subr.mxu0 0.0
    %273 = vmatpush1.msra.mxu0 0.0
    %274 = vmatprep.subr.mxu0 0.0
    %275 = vmatpush1.msra.mxu0 0.0
    %276 = vmatprep.subr.mxu0 0.0
    %277 = vmatpush1.msra.mxu0 0.0
    %278 = vmatprep.mubr.f32.mxu0 0.0
    %279 = vmatmul.mubr.f32.gmra.mrb[0].mxu0 %v169
    %v280 = vpop.f32.mrb[0].mxu0
    %v281 = vadd.f32 %v207, %v280
    %v282 = vpop.f32.mrb[0].mxu0
    %v283 = vadd.f32 %v211, %v282
    %284 = vdwg.mxu0
    %v285 = vmax.f32 %v283, -20.0
    %v286 = vmin.f32 %v285, 2.0
    %v287 = vmul.f32 %v286, 1.442695
    %v288 = vpow.pop %v287
    %v289 = vld [vmem:[#allocation5] sm:$0xff]
    %v290 = vmul.f32 %v288, %v289
    %v291 = vadd.f32 %v281, %v290
    %v292 = vtanh.pop %v291
    %v293 = vmul.f32 %v289, -0.5
    %v294 = vmul.f32 %v293, %v289
    %v295 = vsub.f32 %v294, %v286
    %v296 = vsub.f32 %v295, 0.9189385
    %v297 = vsub.f32 0.6931472, %v291
    %v298 = vmul.f32 %v291, -2.0
    %v299 = vmax.f32 %v298, 0.0
    %vm300 = vcmp.ne.f32.partialorder %v298, %v298
    %v301 = vadd.f32 %v298, 0.0
    %v302 = vand.u32 2147483647, %v298
    %v303 = vsub.f32 0.0, %v302
    %v304 = vmul.f32 %v303, 1.442695
    %v305 = vpow.pop %v304
    %v306 = vadd.f32 %v305, 1.0
    %v307 = vlog2.pop %v306
    %v308 = vmul.f32 %v307, 0.6931472
    %v309 = vmul.f32 -0.5, %v305
    %v310 = vadd.f32 %v309, 1.0
    %v311 = vmul.f32 %v310, %v305
    %v312 = vand.u32 2147483647, %v305
    %vm313 = vcmp.lt.f32.partialorder %v312, 0.0004427343
    %v314 = vsel %vm313, %v311, %v308
    %v315 = vadd.f32 %v299, %v314
    %v316 = vsel %vm300, %v301, %v315
    %v317 = vsub.f32 %v297, %v316
    %v318 = vmul.f32 %v317, 2.0
    %v319 = vlaneseq
    %v320 = vand.u32 %v319, 127
    %vm321 = vcmp.lt.s32.totalorder %v320, 4
    %v322 = vsub.f32 %v296, %v318
    %v323 = vsel %vm321, %v322, 0.0
    %324 = vadd.xlane.f32.xlu0 %v323
    %v325 = vpop.xlane.xlu0 %324
    %v326 = vsel %vm321, %v292, 0.0
    %vm327 = vcmp.eq.s32.totalorder %v320, 4
    %v328 = vsel %vm327, %v325, %v326
    %329 = vst [vmem:[#allocation10] sm:$0xff] %v328
    // Predicated region
    $region42: #{tpu_custom_call.1} parent=1 // pred_check
      _
    $region43: #{tpu_custom_call.1} parent=1 // pred_check_branch
      %331 = sbr.rel (0) target = $region45
    $region44: #{tpu_custom_call.1} parent=1 // pred_region
      %s333 = ssub.s32 128, 128
      %334 = vsyncadd [#allocation4], %s333
      %s336 = sshll.u32 [#allocation10], 4
      %s337 = int_to_ptr.vmem [resolvable:$true] %s336
      %339 = dma.vmem_to_hbm [thread:$0]  %s337, 128, %s6, [#allocation4]
    $region45: #{tpu_custom_call.1} parent=1 // pred_fallthru
      _
    // Predicated region
    $region46: #{tpu_custom_call.1} parent=1 // pred_check
      _
    $region47: #{tpu_custom_call.1} parent=1 // pred_check_branch
      %341 = sbr.rel (0) target = $region49
    $region48: #{tpu_custom_call.1} parent=1 // pred_region
      %342 = dma.done [#allocation4], 128
    $region49: #{tpu_custom_call.1} parent=1 // pred_fallthru
      _
    %343 = vsyncpa [#allocation3], 1
    %344 = vsyncpa [#allocation6], 1
    %345 = vsyncpa [#allocation9], 1
    %346 = vsyncpa [#allocation4], 1

</llo_original>
